<compile_context>
chip_gen: v7x
topology: tpu7x:2x2x1
jax: 0.10.0
libtpu: 0.0.40
codegen_flags: <defaults>
</compile_context>

<pallas_src>
import functools

import jax
import jax.numpy as jnp
from jax.experimental import pallas as pl
from jax.experimental.pallas import tpu as pltpu

HIDDEN = 64  # self.ddd in the PyTorch module


def mlp_kernel(x_ref, w1_ref, w2_ref, o_ref):
    # Cast the streamed x block to bf16 in VMEM (no extra HBM pass); both
    # dots are explicit bf16 x bf16 MXU matmuls with f32 accumulation
    # (avoids the implicit-f32-promotion slowdown).
    xb = x_ref[...].astype(w1_ref.dtype)
    h = jnp.dot(xb, w1_ref[...], preferred_element_type=jnp.float32)   # fc1
    h = jnp.maximum(h, 0.0)                                            # relu
    z = jnp.dot(h.astype(w2_ref.dtype), w2_ref[...],
                preferred_element_type=jnp.float32)                    # fc2
    o_ref[...] = jax.nn.sigmoid(z).astype(o_ref.dtype)                 # sigmoid


def _round_up(a, m):
    return pl.cdiv(a, m) * m


def _pack_config(output_dim):
    """Pick (P, dout_pad): P logical rows packed per lane-dense row, with W2's
    output columns zero-padded from output_dim to dout_pad so that
    P * dout_pad is always a multiple of 128 (lane-dense output)."""
    if output_dim >= 128:
        return 1, _round_up(output_dim, 128)
    dout_pad = pl.next_power_of_2(output_dim)   # <= 128 and divides 128
    return 128 // dout_pad, dout_pad


@functools.partial(jax.jit,
                   static_argnames=("block_rows", "compute_dtype", "out_dtype"))
def mlp_forward(x, w1, w2, *, block_rows=None, compute_dtype=jnp.bfloat16,
                out_dtype=None):
    """x: (B, input_dim); w1: (input_dim, HIDDEN); w2: (HIDDEN, output_dim).

    Weights are stored pre-transposed (in_features, out_features), matching
    x @ W^T of the PyTorch nn.Linear layers. Pass out_dtype=jnp.bfloat16 to
    halve output HBM bytes when downstream consumers allow it.
    """
    B, input_dim = x.shape
    H, output_dim = w2.shape
    out_dtype = x.dtype if out_dtype is None else out_dtype

    P, dout_pad = _pack_config(output_dim)

    # Weights are tiny: cast to bf16 and build block-diagonal packed forms
    # once per call (resident in VMEM inside the kernel).
    w1c = w1.astype(compute_dtype)
    w2c = w2.astype(compute_dtype)
    if dout_pad != output_dim:
        w2c = jnp.pad(w2c, ((0, 0), (0, dout_pad - output_dim)))
    if P > 1:
        eye = jnp.eye(P, dtype=compute_dtype)
        w1p = jnp.kron(eye, w1c)   # (P*input_dim, P*HIDDEN)
        w2p = jnp.kron(eye, w2c)   # (P*HIDDEN,    P*dout_pad)
    else:
        w1p, w2p = w1c, w2c

    din_p, h_p, dout_p = P * input_dim, P * H, P * dout_pad

    # Tile choice: ~1-2 MiB of x per grid step (amortizes per-step pipeline
    # overhead), but keep >= 2 grid steps on large batches so the "parallel"
    # axis can shard across v7x's two TensorCores.
    packed_B_raw = pl.cdiv(B, P)
    if block_rows is None:
        if packed_B_raw <= 512:
            block_rows = max(16, _round_up(packed_B_raw, 16))
        else:
            block_rows = min(2048, _round_up(pl.cdiv(packed_B_raw, 2), 16))

    # Single pad in the original layout, then a FREE contiguous packing reshape.
    padded_packed_B = _round_up(packed_B_raw, block_rows)
    B_total = padded_packed_B * P
    if B_total != B:
        x = jnp.pad(x, ((0, B_total - B), (0, 0)))
    xp = x.reshape(padded_packed_B, din_p)
    grid = (padded_packed_B // block_rows,)

    # Advisory cost estimate (actual packed MXU flops / actual HBM bytes).
    cost = pl.CostEstimate(
        flops=2 * padded_packed_B * (din_p * h_p + h_p * dout_p),
        transcendentals=padded_packed_B * dout_p,
        bytes_accessed=int(xp.size * xp.dtype.itemsize
                           + w1p.size * w1p.dtype.itemsize
                           + w2p.size * w2p.dtype.itemsize
                           + padded_packed_B * dout_p
                           * jnp.dtype(out_dtype).itemsize),
    )

    out_packed = pl.pallas_call(
        mlp_kernel,
        out_shape=jax.ShapeDtypeStruct((padded_packed_B, dout_p), out_dtype),
        grid_spec=pltpu.PrefetchScalarGridSpec(
            num_scalar_prefetch=0,
            grid=grid,
            in_specs=[
                pl.BlockSpec((block_rows, din_p), lambda i: (i, 0)),
                pl.BlockSpec((din_p, h_p), lambda i: (0, 0)),   # resident weights
                pl.BlockSpec((h_p, dout_p), lambda i: (0, 0)),  # resident weights
            ],
            out_specs=pl.BlockSpec((block_rows, dout_p), lambda i: (i, 0)),
        ),
        compiler_params=pltpu.CompilerParams(
            dimension_semantics=("parallel",),
            vmem_limit_bytes=48 * 1024 * 1024,  # headroom on v5e (16 MiB default
                                                # scoped) while below v7x's 64 MiB
        ),
        cost_estimate=cost,
    )(xp, w1p, w2p)

    # Free contiguous reshape back to (rows, dout_pad); drop padded rows/cols.
    out = out_packed.reshape(padded_packed_B * P, dout_pad)
    if dout_pad != output_dim:
        out = out[:, :output_dim]
    return out[:B]


def init_params(key, input_dim, output_dim, dtype=jnp.float32):
    """nn.Linear default init U(-1/sqrt(fan_in), +1/sqrt(fan_in));
    stored pre-transposed as (in_features, out_features)."""
    k1, k2 = jax.random.split(key)
    b1 = 1.0 / jnp.sqrt(jnp.array(input_dim, dtype))
    b2 = 1.0 / jnp.sqrt(jnp.array(HIDDEN, dtype))
    w1 = jax.random.uniform(k1, (input_dim, HIDDEN), dtype, -b1, b1)
    w2 = jax.random.uniform(k2, (HIDDEN, output_dim), dtype, -b2, b2)
    return w1, w2


if __name__ == "__main__":
    key = jax.random.PRNGKey(0)
    kx, kp, kx2 = jax.random.split(key, 3)

    input_dim, output_dim = 32, 16
    w1, w2 = init_params(kp, input_dim, output_dim)

    # Small case (matches the PyTorch module at a tiny batch).
    batch = 8
    x = jax.random.normal(kx, (batch, input_dim), jnp.float32)
    out = jax.block_until_ready(mlp_forward(x, w1, w2))
    ref = jax.nn.sigmoid(jnp.maximum(x @ w1, 0.0) @ w2)
    assert out.shape == (batch, output_dim)
    assert jnp.allclose(out, ref, atol=2e-2, rtol=0.0), \
        float(jnp.max(jnp.abs(out - ref)))

    # Larger ragged batch: exercises single-pad path + multi-step parallel grid.
    batch2 = 4100
    x2 = jax.random.normal(kx2, (batch2, input_dim), jnp.float32)
    out2 = jax.block_until_ready(mlp_forward(x2, w1, w2))
    ref2 = jax.nn.sigmoid(jnp.maximum(x2 @ w1, 0.0) @ w2)
    assert out2.shape == (batch2, output_dim)
    assert jnp.allclose(out2, ref2, atol=2e-2, rtol=0.0), \
        float(jnp.max(jnp.abs(out2 - ref2)))

    print("KERNEL_OK")
</pallas_src>

<mosaic_0001>
module attributes {stable_mosaic.version = 11 : i64} {
  func.func @mlp_kernel(%arg0: i32, %arg1: memref<16x256xf32, #tpu.memory_space<vmem>>, %arg2: memref<256x512xbf16, #tpu.memory_space<vmem>>, %arg3: memref<512x128xbf16, #tpu.memory_space<vmem>>, %arg4: memref<16x128xf32, #tpu.memory_space<vmem>>) attributes {dimension_semantics = [#tpu.dimension_semantics<parallel>], iteration_bounds = array<i64: 1>, scalar_prefetch = 0 : i64, scratch_operands = 0 : i64, tpu.core_type = #tpu.core_type<tc>, window_params = [{transform_indices = @transform_0, window_bounds = array<i64: 16, 256>}, {pipeline_mode = #tpu.pipeline_mode<synchronous>, transform_indices = @transform_1, window_bounds = array<i64: 256, 512>}, {pipeline_mode = #tpu.pipeline_mode<synchronous>, transform_indices = @transform_2, window_bounds = array<i64: 512, 128>}, {transform_indices = @transform_3, window_bounds = array<i64: 16, 128>}]} {
    %c0 = arith.constant 0 : index
    %c0_0 = arith.constant 0 : index
    %0 = vector.load %arg1[%c0, %c0_0] : memref<16x256xf32, #tpu.memory_space<vmem>>, vector<16x256xf32>
    %1 = arith.truncf %0 : vector<16x256xf32> to vector<16x256xbf16>
    %c0_1 = arith.constant 0 : index
    %c0_2 = arith.constant 0 : index
    %2 = vector.load %arg2[%c0_1, %c0_2] : memref<256x512xbf16, #tpu.memory_space<vmem>>, vector<256x512xbf16>
    %cst = arith.constant dense<0.000000e+00> : vector<16x512xf32>
    %3 = tpu.matmul %1, %2, %cst {dimension_numbers = #tpu.dot_dimension_numbers<[1], [0], [0], [1], [0, 0, 1, 1], [], []>} : vector<16x256xbf16>, vector<256x512xbf16>, vector<16x512xf32> -> vector<16x512xf32>
    %cst_3 = arith.constant 0.000000e+00 : f32
    %4 = vector.broadcast %cst_3 : f32 to vector<16x512xf32>
    %5 = arith.maximumf %3, %4 : vector<16x512xf32>
    %6 = arith.truncf %5 : vector<16x512xf32> to vector<16x512xbf16>
    %c0_4 = arith.constant 0 : index
    %c0_5 = arith.constant 0 : index
    %7 = vector.load %arg3[%c0_4, %c0_5] : memref<512x128xbf16, #tpu.memory_space<vmem>>, vector<512x128xbf16>
    %cst_6 = arith.constant dense<0.000000e+00> : vector<16x128xf32>
    %8 = tpu.matmul %6, %7, %cst_6 {dimension_numbers = #tpu.dot_dimension_numbers<[1], [0], [0], [1], [0, 0, 1, 1], [], []>} : vector<16x512xbf16>, vector<512x128xbf16>, vector<16x128xf32> -> vector<16x128xf32>
    %9 = arith.negf %8 : vector<16x128xf32>
    %10 = math.exp %9 : vector<16x128xf32>
    %cst_7 = arith.constant 1.000000e+00 : f32
    %11 = vector.broadcast %cst_7 : f32 to vector<16x128xf32>
    %12 = arith.addf %11, %10 : vector<16x128xf32>
    %13 = arith.divf %11, %12 : vector<16x128xf32>
    %c0_8 = arith.constant 0 : index
    %c0_9 = arith.constant 0 : index
    %14 = vector.load %arg4[%c0_8, %c0_9] : memref<16x128xf32, #tpu.memory_space<vmem>>, vector<16x128xf32>
    tpu.vector_store %arg4[%c0_8, %c0_9], %13 {strides = array<i32>} : memref<16x128xf32, #tpu.memory_space<vmem>>, vector<16x128xf32>,
    return
  }
  func.func @transform_0(%arg0: i32) -> (i32, i32) {
    %c0_i32 = arith.constant 0 : i32
    %c0_i32_0 = arith.constant 0 : i32
    return %arg0, %c0_i32 : i32, i32
  }
  func.func @transform_1(%arg0: i32) -> (i32, i32) {
    %c0_i32 = arith.constant 0 : i32
    %c0_i32_0 = arith.constant 0 : i32
    %c0_i32_1 = arith.constant 0 : i32
    return %c0_i32, %c0_i32_0 : i32, i32
  }
  func.func @transform_2(%arg0: i32) -> (i32, i32) {
    %c0_i32 = arith.constant 0 : i32
    %c0_i32_0 = arith.constant 0 : i32
    %c0_i32_1 = arith.constant 0 : i32
    return %c0_i32, %c0_i32_0 : i32, i32
  }
  func.func @transform_3(%arg0: i32) -> (i32, i32) {
    %c0_i32 = arith.constant 0 : i32
    %c0_i32_0 = arith.constant 0 : i32
    return %arg0, %c0_i32 : i32, i32
  }
}

</mosaic_0001>

<llo_original>
// kernel: mlp_forward.1
$region0: #{mlp_forward.1}
  #allocation0 [shape = 'u32[]', space=smem, size = 0x4, offset = 0x4, fixed_abs, tag = 'smem constant byte address 0x4 - core index']
  #allocation1 [shape = 'u32[144,128]{1,0:T(1,128)}', space=vmem, size = 0x12000, scoped, tag = 'internal scratch']
  %s0 = inlined_call_operand.vmem [shape: f32[16,256], index: 0, kind: input, shape index: {}]
  %s1 = inlined_call_operand.vmem [shape: bf16[256,512], index: 1, kind: input, shape index: {}]
  %s2 = inlined_call_operand.vmem [shape: bf16[512,128], index: 2, kind: input, shape index: {}]
  %s3 = inlined_call_operand.vmem [shape: f32[16,128], index: 3, kind: output, shape index: {}]
  %s4 = sld [smem:[#allocation0]]
  $region22: #{mlp_forward.1} parent=0
    _
  %s6 = ssub.s32 1, %s4
  %s7 = scalar_select 0, %s6, %s4
  // Predicated region
  $region2: #{mlp_forward.1} parent=0 // pred_check
    _
  $region3: #{mlp_forward.1} parent=0 // pred_check_branch
    %9 = sbr.rel (0) target = $region5
  $region4: #{mlp_forward.1} parent=0 // pred_region
    _
  $region5: #{mlp_forward.1} parent=0 // pred_fallthru
    _
  // Predicated region
  $region6: #{mlp_forward.1} parent=0 // pred_check
    _
  $region7: #{mlp_forward.1} parent=0 // pred_check_branch
    %11 = sbr.rel (0) target = $region9
  $region8: #{mlp_forward.1} parent=0 // pred_region
    _
  $region9: #{mlp_forward.1} parent=0 // pred_fallthru
    _
  // Predicated region
  $region10: #{mlp_forward.1} parent=0 // pred_check
    _
  $region11: #{mlp_forward.1} parent=0 // pred_check_branch
    %13 = sbr.rel (0) target = $region13
  $region12: #{mlp_forward.1} parent=0 // pred_region
    _
  $region13: #{mlp_forward.1} parent=0 // pred_fallthru
    _
  %v15 = vld [vmem:[%s0] sm:$0xff]
  %v16 = vld [vmem:[%s0 + $0x8] sm:$0xff]
  %v17 = vld [vmem:[%s0 + $0x10] sm:$0xff]
  %v18 = vld [vmem:[%s0 + $0x18] sm:$0xff]
  %v19 = vpack.c.bf16 %v17, %v15
  %v20 = vpack.c.bf16 %v18, %v16
  %v21 = vld [vmem:[%s1] sm:$0xff]
  %v22 = vld [vmem:[%s1 + $0x8] sm:$0xff]
  %v23 = vld [vmem:[%s1 + $0x10] sm:$0xff]
  %v24 = vld [vmem:[%s1 + $0x18] sm:$0xff]
  %v25 = vld [vmem:[%s1 + $0x20] sm:$0xff]
  %v26 = vld [vmem:[%s1 + $0x28] sm:$0xff]
  %v27 = vld [vmem:[%s1 + $0x30] sm:$0xff]
  %v28 = vld [vmem:[%s1 + $0x38] sm:$0xff]
  %v29 = vld [vmem:[%s1 + $0x40] sm:$0xff]
  %v30 = vld [vmem:[%s1 + $0x48] sm:$0xff]
  %v31 = vld [vmem:[%s1 + $0x50] sm:$0xff]
  %v32 = vld [vmem:[%s1 + $0x58] sm:$0xff]
  %v33 = vld [vmem:[%s1 + $0x60] sm:$0xff]
  %v34 = vld [vmem:[%s1 + $0x68] sm:$0xff]
  %v35 = vld [vmem:[%s1 + $0x70] sm:$0xff]
  %v36 = vld [vmem:[%s1 + $0x78] sm:$0xff]
  %v37 = vld [vmem:[%s1 + $0x80] sm:$0xff]
  %v38 = vld [vmem:[%s1 + $0x88] sm:$0xff]
  %v39 = vld [vmem:[%s1 + $0x90] sm:$0xff]
  %v40 = vld [vmem:[%s1 + $0x98] sm:$0xff]
  %v41 = vld [vmem:[%s1 + $0xa0] sm:$0xff]
  %v42 = vld [vmem:[%s1 + $0xa8] sm:$0xff]
  %v43 = vld [vmem:[%s1 + $0xb0] sm:$0xff]
  %v44 = vld [vmem:[%s1 + $0xb8] sm:$0xff]
  %v45 = vld [vmem:[%s1 + $0xc0] sm:$0xff]
  %v46 = vld [vmem:[%s1 + $0xc8] sm:$0xff]
  %v47 = vld [vmem:[%s1 + $0xd0] sm:$0xff]
  %v48 = vld [vmem:[%s1 + $0xd8] sm:$0xff]
  %v49 = vld [vmem:[%s1 + $0xe0] sm:$0xff]
  %v50 = vld [vmem:[%s1 + $0xe8] sm:$0xff]
  %v51 = vld [vmem:[%s1 + $0xf0] sm:$0xff]
  %v52 = vld [vmem:[%s1 + $0xf8] sm:$0xff]
  %v53 = vld [vmem:[%s1 + $0x100] sm:$0xff]
  %v54 = vld [vmem:[%s1 + $0x108] sm:$0xff]
  %v55 = vld [vmem:[%s1 + $0x110] sm:$0xff]
  %v56 = vld [vmem:[%s1 + $0x118] sm:$0xff]
  %v57 = vld [vmem:[%s1 + $0x120] sm:$0xff]
  %v58 = vld [vmem:[%s1 + $0x128] sm:$0xff]
  %v59 = vld [vmem:[%s1 + $0x130] sm:$0xff]
  %v60 = vld [vmem:[%s1 + $0x138] sm:$0xff]
  %v61 = vld [vmem:[%s1 + $0x140] sm:$0xff]
  %v62 = vld [vmem:[%s1 + $0x148] sm:$0xff]
  %v63 = vld [vmem:[%s1 + $0x150] sm:$0xff]
  %v64 = vld [vmem:[%s1 + $0x158] sm:$0xff]
  %v65 = vld [vmem:[%s1 + $0x160] sm:$0xff]
  %v66 = vld [vmem:[%s1 + $0x168] sm:$0xff]
  %v67 = vld [vmem:[%s1 + $0x170] sm:$0xff]
  %v68 = vld [vmem:[%s1 + $0x178] sm:$0xff]
  %v69 = vld [vmem:[%s1 + $0x180] sm:$0xff]
  %v70 = vld [vmem:[%s1 + $0x188] sm:$0xff]
  %v71 = vld [vmem:[%s1 + $0x190] sm:$0xff]
  %v72 = vld [vmem:[%s1 + $0x198] sm:$0xff]
  %v73 = vld [vmem:[%s1 + $0x1a0] sm:$0xff]
  %v74 = vld [vmem:[%s1 + $0x1a8] sm:$0xff]
  %v75 = vld [vmem:[%s1 + $0x1b0] sm:$0xff]
  %v76 = vld [vmem:[%s1 + $0x1b8] sm:$0xff]
  %v77 = vld [vmem:[%s1 + $0x1c0] sm:$0xff]
  %v78 = vld [vmem:[%s1 + $0x1c8] sm:$0xff]
  %v79 = vld [vmem:[%s1 + $0x1d0] sm:$0xff]
  %v80 = vld [vmem:[%s1 + $0x1d8] sm:$0xff]
  %v81 = vld [vmem:[%s1 + $0x1e0] sm:$0xff]
  %v82 = vld [vmem:[%s1 + $0x1e8] sm:$0xff]
  %v83 = vld [vmem:[%s1 + $0x1f0] sm:$0xff]
  %v84 = vld [vmem:[%s1 + $0x1f8] sm:$0xff]
  %v149 = vunpack.c.l.b16 %v21
  %v150 = vunpack.c.h.b16 %v21
  %v151 = vunpack.c.l.b16 %v22
  %v152 = vunpack.c.h.b16 %v22
  %v153 = vunpack.c.l.b16 %v23
  %v154 = vunpack.c.h.b16 %v23
  %v155 = vunpack.c.l.b16 %v24
  %v156 = vunpack.c.h.b16 %v24
  %v157 = vunpack.c.l.b16 %v25
  %v158 = vunpack.c.h.b16 %v25
  %v159 = vunpack.c.l.b16 %v26
  %v160 = vunpack.c.h.b16 %v26
  %v161 = vunpack.c.l.b16 %v27
  %v162 = vunpack.c.h.b16 %v27
  %v163 = vunpack.c.l.b16 %v28
  %v164 = vunpack.c.h.b16 %v28
  %v165 = vunpack.c.l.b16 %v29
  %v166 = vunpack.c.h.b16 %v29
  %v167 = vunpack.c.l.b16 %v30
  %v168 = vunpack.c.h.b16 %v30
  %v169 = vunpack.c.l.b16 %v31
  %v170 = vunpack.c.h.b16 %v31
  %v171 = vunpack.c.l.b16 %v32
  %v172 = vunpack.c.h.b16 %v32
  %v173 = vunpack.c.l.b16 %v33
  %v174 = vunpack.c.h.b16 %v33
  %v175 = vunpack.c.l.b16 %v34
  %v176 = vunpack.c.h.b16 %v34
  %v177 = vunpack.c.l.b16 %v35
  %v178 = vunpack.c.h.b16 %v35
  %v179 = vunpack.c.l.b16 %v36
  %v180 = vunpack.c.h.b16 %v36
  %v181 = vunpack.c.l.b16 %v37
  %v182 = vunpack.c.h.b16 %v37
  %v183 = vunpack.c.l.b16 %v38
  %v184 = vunpack.c.h.b16 %v38
  %v185 = vunpack.c.l.b16 %v39
  %v186 = vunpack.c.h.b16 %v39
  %v187 = vunpack.c.l.b16 %v40
  %v188 = vunpack.c.h.b16 %v40
  %v189 = vunpack.c.l.b16 %v41
  %v190 = vunpack.c.h.b16 %v41
  %v191 = vunpack.c.l.b16 %v42
  %v192 = vunpack.c.h.b16 %v42
  %v193 = vunpack.c.l.b16 %v43
  %v194 = vunpack.c.h.b16 %v43
  %v195 = vunpack.c.l.b16 %v44
  %v196 = vunpack.c.h.b16 %v44
  %v197 = vunpack.c.l.b16 %v45
  %v198 = vunpack.c.h.b16 %v45
  %v199 = vunpack.c.l.b16 %v46
  %v200 = vunpack.c.h.b16 %v46
  %v201 = vunpack.c.l.b16 %v47
  %v202 = vunpack.c.h.b16 %v47
  %v203 = vunpack.c.l.b16 %v48
  %v204 = vunpack.c.h.b16 %v48
  %v205 = vunpack.c.l.b16 %v49
  %v206 = vunpack.c.h.b16 %v49
  %v207 = vunpack.c.l.b16 %v50
  %v208 = vunpack.c.h.b16 %v50
  %v209 = vunpack.c.l.b16 %v51
  %v210 = vunpack.c.h.b16 %v51
  %v211 = vunpack.c.l.b16 %v52
  %v212 = vunpack.c.h.b16 %v52
  %v213 = vunpack.c.l.b16 %v53
  %v214 = vunpack.c.h.b16 %v53
  %v215 = vunpack.c.l.b16 %v54
  %v216 = vunpack.c.h.b16 %v54
  %v217 = vunpack.c.l.b16 %v55
  %v218 = vunpack.c.h.b16 %v55
  %v219 = vunpack.c.l.b16 %v56
  %v220 = vunpack.c.h.b16 %v56
  %v221 = vunpack.c.l.b16 %v57
  %v222 = vunpack.c.h.b16 %v57
  %v223 = vunpack.c.l.b16 %v58
  %v224 = vunpack.c.h.b16 %v58
  %v225 = vunpack.c.l.b16 %v59
  %v226 = vunpack.c.h.b16 %v59
  %v227 = vunpack.c.l.b16 %v60
  %v228 = vunpack.c.h.b16 %v60
  %v229 = vunpack.c.l.b16 %v61
  %v230 = vunpack.c.h.b16 %v61
  %v231 = vunpack.c.l.b16 %v62
  %v232 = vunpack.c.h.b16 %v62
  %v233 = vunpack.c.l.b16 %v63
  %v234 = vunpack.c.h.b16 %v63
  %v235 = vunpack.c.l.b16 %v64
  %v236 = vunpack.c.h.b16 %v64
  %v237 = vunpack.c.l.b16 %v65
  %v238 = vunpack.c.h.b16 %v65
  %v239 = vunpack.c.l.b16 %v66
  %v240 = vunpack.c.h.b16 %v66
  %v241 = vunpack.c.l.b16 %v67
  %v242 = vunpack.c.h.b16 %v67
  %v243 = vunpack.c.l.b16 %v68
  %v244 = vunpack.c.h.b16 %v68
  %v245 = vunpack.c.l.b16 %v69
  %v246 = vunpack.c.h.b16 %v69
  %v247 = vunpack.c.l.b16 %v70
  %v248 = vunpack.c.h.b16 %v70
  %v249 = vunpack.c.l.b16 %v71
  %v250 = vunpack.c.h.b16 %v71
  %v251 = vunpack.c.l.b16 %v72
  %v252 = vunpack.c.h.b16 %v72
  %v253 = vunpack.c.l.b16 %v73
  %v254 = vunpack.c.h.b16 %v73
  %v255 = vunpack.c.l.b16 %v74
  %v256 = vunpack.c.h.b16 %v74
  %v257 = vunpack.c.l.b16 %v75
  %v258 = vunpack.c.h.b16 %v75
  %v259 = vunpack.c.l.b16 %v76
  %v260 = vunpack.c.h.b16 %v76
  %v261 = vunpack.c.l.b16 %v77
  %v262 = vunpack.c.h.b16 %v77
  %v263 = vunpack.c.l.b16 %v78
  %v264 = vunpack.c.h.b16 %v78
  %v265 = vunpack.c.l.b16 %v79
  %v266 = vunpack.c.h.b16 %v79
  %v267 = vunpack.c.l.b16 %v80
  %v268 = vunpack.c.h.b16 %v80
  %v269 = vunpack.c.l.b16 %v81
  %v270 = vunpack.c.h.b16 %v81
  %v271 = vunpack.c.l.b16 %v82
  %v272 = vunpack.c.h.b16 %v82
  %v273 = vunpack.c.l.b16 %v83
  %v274 = vunpack.c.h.b16 %v83
  %v275 = vunpack.c.l.b16 %v84
  %v276 = vunpack.c.h.b16 %v84
  %v277 = vpack.c.b16 %v153, %v149
  %v278 = vpack.c.b16 %v154, %v150
  %v279 = vpack.c.b16 %v155, %v151
  %v280 = vpack.c.b16 %v156, %v152
  %v281 = vpack.c.b16 %v161, %v157
  %v282 = vpack.c.b16 %v162, %v158
  %v283 = vpack.c.b16 %v163, %v159
  %v284 = vpack.c.b16 %v164, %v160
  %v285 = vpack.c.b16 %v169, %v165
  %v286 = vpack.c.b16 %v170, %v166
  %v287 = vpack.c.b16 %v171, %v167
  %v288 = vpack.c.b16 %v172, %v168
  %v289 = vpack.c.b16 %v177, %v173
  %v290 = vpack.c.b16 %v178, %v174
  %v291 = vpack.c.b16 %v179, %v175
  %v292 = vpack.c.b16 %v180, %v176
  %v293 = vpack.c.b16 %v185, %v181
  %v294 = vpack.c.b16 %v186, %v182
  %v295 = vpack.c.b16 %v187, %v183
  %v296 = vpack.c.b16 %v188, %v184
  %v297 = vpack.c.b16 %v193, %v189
  %v298 = vpack.c.b16 %v194, %v190
  %v299 = vpack.c.b16 %v195, %v191
  %v300 = vpack.c.b16 %v196, %v192
  %v301 = vpack.c.b16 %v201, %v197
  %v302 = vpack.c.b16 %v202, %v198
  %v303 = vpack.c.b16 %v203, %v199
  %v304 = vpack.c.b16 %v204, %v200
  %v305 = vpack.c.b16 %v209, %v205
  %v306 = vpack.c.b16 %v210, %v206
  %v307 = vpack.c.b16 %v211, %v207
  %v308 = vpack.c.b16 %v212, %v208
  %v309 = vpack.c.b16 %v217, %v213
  %v310 = vpack.c.b16 %v218, %v214
  %v311 = vpack.c.b16 %v219, %v215
  %v312 = vpack.c.b16 %v220, %v216
  %v313 = vpack.c.b16 %v225, %v221
  %v314 = vpack.c.b16 %v226, %v222
  %v315 = vpack.c.b16 %v227, %v223
  %v316 = vpack.c.b16 %v228, %v224
  %v317 = vpack.c.b16 %v233, %v229
  %v318 = vpack.c.b16 %v234, %v230
  %v319 = vpack.c.b16 %v235, %v231
  %v320 = vpack.c.b16 %v236, %v232
  %v321 = vpack.c.b16 %v241, %v237
  %v322 = vpack.c.b16 %v242, %v238
  %v323 = vpack.c.b16 %v243, %v239
  %v324 = vpack.c.b16 %v244, %v240
  %v325 = vpack.c.b16 %v249, %v245
  %v326 = vpack.c.b16 %v250, %v246
  %v327 = vpack.c.b16 %v251, %v247
  %v328 = vpack.c.b16 %v252, %v248
  %v329 = vpack.c.b16 %v257, %v253
  %v330 = vpack.c.b16 %v258, %v254
  %v331 = vpack.c.b16 %v259, %v255
  %v332 = vpack.c.b16 %v260, %v256
  %v333 = vpack.c.b16 %v265, %v261
  %v334 = vpack.c.b16 %v266, %v262
  %v335 = vpack.c.b16 %v267, %v263
  %v336 = vpack.c.b16 %v268, %v264
  %v337 = vpack.c.b16 %v273, %v269
  %v338 = vpack.c.b16 %v274, %v270
  %v339 = vpack.c.b16 %v275, %v271
  %v340 = vpack.c.b16 %v276, %v272
  %405 = vmatprep.subr.bf16.mxu0 %v278
  %406 = vmatpush1.bf16.msra.mxu0 %v277
  %407 = vmatprep.subr.bf16.mxu0 %v282
  %408 = vmatpush1.bf16.msra.mxu0 %v281
  %409 = vmatprep.subr.bf16.mxu0 %v286
  %410 = vmatpush1.bf16.msra.mxu0 %v285
  %411 = vmatprep.subr.bf16.mxu0 %v290
  %412 = vmatpush1.bf16.msra.mxu0 %v289
  %413 = vmatprep.subr.bf16.mxu0 %v294
  %414 = vmatpush1.bf16.msra.mxu0 %v293
  %415 = vmatprep.subr.bf16.mxu0 %v298
  %416 = vmatpush1.bf16.msra.mxu0 %v297
  %417 = vmatprep.subr.bf16.mxu0 %v302
  %418 = vmatpush1.bf16.msra.mxu0 %v301
  %419 = vmatprep.subr.bf16.mxu0 %v306
  %420 = vmatpush1.bf16.msra.mxu0 %v305
  %421 = vmatprep.subr.bf16.mxu0 %v310
  %422 = vmatpush1.bf16.msra.mxu0 %v309
  %423 = vmatprep.subr.bf16.mxu0 %v314
  %424 = vmatpush1.bf16.msra.mxu0 %v313
  %425 = vmatprep.subr.bf16.mxu0 %v318
  %426 = vmatpush1.bf16.msra.mxu0 %v317
  %427 = vmatprep.subr.bf16.mxu0 %v322
  %428 = vmatpush1.bf16.msra.mxu0 %v321
  %429 = vmatprep.subr.bf16.mxu0 %v326
  %430 = vmatpush1.bf16.msra.mxu0 %v325
  %431 = vmatprep.subr.bf16.mxu0 %v330
  %432 = vmatpush1.bf16.msra.mxu0 %v329
  %433 = vmatprep.subr.bf16.mxu0 %v334
  %434 = vmatpush1.bf16.msra.mxu0 %v333
  %435 = vmatprep.subr.bf16.mxu0 %v338
  %436 = vmatpush1.bf16.msra.mxu0 %v337
  %437 = vmatprep.mubr.bf16.mxu0 %v20
  %438 = vmatmul.mubr.bf16.gmra.mrb[0].mxu0 %v19
  %v439 = vpop.f32.mrb[0].mxu0
  %v440 = vadd.f32 0.0, %v439
  %v441 = vpop.f32.mrb[0].mxu0
  %v442 = vadd.f32 0.0, %v441
  %v443 = vpop.f32.mrb[0].mxu0
  %v444 = vadd.f32 0.0, %v443
  %v445 = vpop.f32.mrb[0].mxu0
  %v446 = vadd.f32 0.0, %v445
  %447 = vdwg.mxu0
  %448 = vmatprep.subr.bf16.mxu0 %v280
  %449 = vmatpush1.bf16.msra.mxu0 %v279
  %450 = vmatprep.subr.bf16.mxu0 %v284
  %451 = vmatpush1.bf16.msra.mxu0 %v283
  %452 = vmatprep.subr.bf16.mxu0 %v288
  %453 = vmatpush1.bf16.msra.mxu0 %v287
  %454 = vmatprep.subr.bf16.mxu0 %v292
  %455 = vmatpush1.bf16.msra.mxu0 %v291
  %456 = vmatprep.subr.bf16.mxu0 %v296
  %457 = vmatpush1.bf16.msra.mxu0 %v295
  %458 = vmatprep.subr.bf16.mxu0 %v300
  %459 = vmatpush1.bf16.msra.mxu0 %v299
  %460 = vmatprep.subr.bf16.mxu0 %v304
  %461 = vmatpush1.bf16.msra.mxu0 %v303
  %462 = vmatprep.subr.bf16.mxu0 %v308
  %463 = vmatpush1.bf16.msra.mxu0 %v307
  %464 = vmatprep.subr.bf16.mxu0 %v312
  %465 = vmatpush1.bf16.msra.mxu0 %v311
  %466 = vmatprep.subr.bf16.mxu0 %v316
  %467 = vmatpush1.bf16.msra.mxu0 %v315
  %468 = vmatprep.subr.bf16.mxu0 %v320
  %469 = vmatpush1.bf16.msra.mxu0 %v319
  %470 = vmatprep.subr.bf16.mxu0 %v324
  %471 = vmatpush1.bf16.msra.mxu0 %v323
  %472 = vmatprep.subr.bf16.mxu0 %v328
  %473 = vmatpush1.bf16.msra.mxu0 %v327
  %474 = vmatprep.subr.bf16.mxu0 %v332
  %475 = vmatpush1.bf16.msra.mxu0 %v331
  %476 = vmatprep.subr.bf16.mxu0 %v336
  %477 = vmatpush1.bf16.msra.mxu0 %v335
  %478 = vmatprep.subr.bf16.mxu0 %v340
  %479 = vmatpush1.bf16.msra.mxu0 %v339
  %480 = vmatprep.mubr.bf16.mxu0 %v20
  %481 = vmatmul.mubr.bf16.gmra.mrb[0].mxu0 %v19
  %v482 = vpop.f32.mrb[0].mxu0
  %v483 = vadd.f32 0.0, %v482
  %v484 = vpop.f32.mrb[0].mxu0
  %v485 = vadd.f32 0.0, %v484
  %v486 = vpop.f32.mrb[0].mxu0
  %v487 = vadd.f32 0.0, %v486
  %v488 = vpop.f32.mrb[0].mxu0
  %v489 = vadd.f32 0.0, %v488
  %490 = vdwg.mxu0
  %v491 = vmax.f32 %v440, 0.0
  %v492 = vmax.f32 %v442, 0.0
  %v493 = vmax.f32 %v483, 0.0
  %v494 = vmax.f32 %v485, 0.0
  %v495 = vmax.f32 %v444, 0.0
  %v496 = vmax.f32 %v446, 0.0
  %v497 = vmax.f32 %v487, 0.0
  %v498 = vmax.f32 %v489, 0.0
  %v499 = vpack.c.bf16 %v495, %v491
  %v500 = vpack.c.bf16 %v496, %v492
  %v501 = vpack.c.bf16 %v497, %v493
  %v502 = vpack.c.bf16 %v498, %v494
  %v503 = vld [vmem:[%s2] sm:$0xf]
  %v504 = vld [vmem:[%s2 + $0x4] sm:$0xf]
  %v505 = vld [vmem:[%s2 + $0x8] sm:$0xf]
  %v506 = vld [vmem:[%s2 + $0xc] sm:$0xf]
  %v507 = vld [vmem:[%s2 + $0x10] sm:$0xf]
  %v508 = vld [vmem:[%s2 + $0x14] sm:$0xf]
  %v509 = vld [vmem:[%s2 + $0x18] sm:$0xf]
  %v510 = vld [vmem:[%s2 + $0x1c] sm:$0xf]
  %v511 = vld [vmem:[%s2 + $0x20] sm:$0xf]
  %v512 = vld [vmem:[%s2 + $0x24] sm:$0xf]
  %v513 = vld [vmem:[%s2 + $0x28] sm:$0xf]
  %v514 = vld [vmem:[%s2 + $0x2c] sm:$0xf]
  %v515 = vld [vmem:[%s2 + $0x30] sm:$0xf]
  %v516 = vld [vmem:[%s2 + $0x34] sm:$0xf]
  %v517 = vld [vmem:[%s2 + $0x38] sm:$0xf]
  %v518 = vld [vmem:[%s2 + $0x3c] sm:$0xf]
  %v519 = vld [vmem:[%s2 + $0x40] sm:$0xf]
  %v520 = vld [vmem:[%s2 + $0x44] sm:$0xf]
  %v521 = vld [vmem:[%s2 + $0x48] sm:$0xf]
  %v522 = vld [vmem:[%s2 + $0x4c] sm:$0xf]
  %v523 = vld [vmem:[%s2 + $0x50] sm:$0xf]
  %v524 = vld [vmem:[%s2 + $0x54] sm:$0xf]
  %v525 = vld [vmem:[%s2 + $0x58] sm:$0xf]
  %v526 = vld [vmem:[%s2 + $0x5c] sm:$0xf]
  %v527 = vld [vmem:[%s2 + $0x60] sm:$0xf]
  %v528 = vld [vmem:[%s2 + $0x64] sm:$0xf]
  %v529 = vld [vmem:[%s2 + $0x68] sm:$0xf]
  %v530 = vld [vmem:[%s2 + $0x6c] sm:$0xf]
  %v531 = vld [vmem:[%s2 + $0x70] sm:$0xf]
  %v532 = vld [vmem:[%s2 + $0x74] sm:$0xf]
  %v533 = vld [vmem:[%s2 + $0x78] sm:$0xf]
  %v534 = vld [vmem:[%s2 + $0x7c] sm:$0xf]
  %v535 = vld [vmem:[%s2 + $0x80] sm:$0xf]
  %v536 = vld [vmem:[%s2 + $0x84] sm:$0xf]
  %v537 = vld [vmem:[%s2 + $0x88] sm:$0xf]
  %v538 = vld [vmem:[%s2 + $0x8c] sm:$0xf]
  %v539 = vld [vmem:[%s2 + $0x90] sm:$0xf]
  %v540 = vld [vmem:[%s2 + $0x94] sm:$0xf]
  %v541 = vld [vmem:[%s2 + $0x98] sm:$0xf]
  %v542 = vld [vmem:[%s2 + $0x9c] sm:$0xf]
  %v543 = vld [vmem:[%s2 + $0xa0] sm:$0xf]
  %v544 = vld [vmem:[%s2 + $0xa4] sm:$0xf]
  %v545 = vld [vmem:[%s2 + $0xa8] sm:$0xf]
  %v546 = vld [vmem:[%s2 + $0xac] sm:$0xf]
  %v547 = vld [vmem:[%s2 + $0xb0] sm:$0xf]
  %v548 = vld [vmem:[%s2 + $0xb4] sm:$0xf]
  %v549 = vld [vmem:[%s2 + $0xb8] sm:$0xf]
  %v550 = vld [vmem:[%s2 + $0xbc] sm:$0xf]
  %v551 = vld [vmem:[%s2 + $0xc0] sm:$0xf]
  %v552 = vld [vmem:[%s2 + $0xc4] sm:$0xf]
  %v553 = vld [vmem:[%s2 + $0xc8] sm:$0xf]
  %v554 = vld [vmem:[%s2 + $0xcc] sm:$0xf]
  %v555 = vld [vmem:[%s2 + $0xd0] sm:$0xf]
  %v556 = vld [vmem:[%s2 + $0xd4] sm:$0xf]
  %v557 = vld [vmem:[%s2 + $0xd8] sm:$0xf]
  %v558 = vld [vmem:[%s2 + $0xdc] sm:$0xf]
  %v559 = vld [vmem:[%s2 + $0xe0] sm:$0xf]
  %v560 = vld [vmem:[%s2 + $0xe4] sm:$0xf]
  %v561 = vld [vmem:[%s2 + $0xe8] sm:$0xf]
  %v562 = vld [vmem:[%s2 + $0xec] sm:$0xf]
  %v563 = vld [vmem:[%s2 + $0xf0] sm:$0xf]
  %v564 = vld [vmem:[%s2 + $0xf4] sm:$0xf]
  %v565 = vld [vmem:[%s2 + $0xf8] sm:$0xf]
  %v566 = vld [vmem:[%s2 + $0xfc] sm:$0xf]
  %v631 = vunpack.c.l.b16 %v503
  %v632 = vunpack.c.l.b16 %v504
  %v633 = vunpack.c.l.b16 %v505
  %v634 = vunpack.c.l.b16 %v506
  %v635 = vunpack.c.l.b16 %v507
  %v636 = vunpack.c.l.b16 %v508
  %v637 = vunpack.c.l.b16 %v509
  %v638 = vunpack.c.l.b16 %v510
  %v639 = vunpack.c.l.b16 %v511
  %v640 = vunpack.c.l.b16 %v512
  %v641 = vunpack.c.l.b16 %v513
  %v642 = vunpack.c.l.b16 %v514
  %v643 = vunpack.c.l.b16 %v515
  %v644 = vunpack.c.l.b16 %v516
  %v645 = vunpack.c.l.b16 %v517
  %v646 = vunpack.c.l.b16 %v518
  %v647 = vunpack.c.l.b16 %v519
  %v648 = vunpack.c.l.b16 %v520
  %v649 = vunpack.c.l.b16 %v521
  %v650 = vunpack.c.l.b16 %v522
  %v651 = vunpack.c.l.b16 %v523
  %v652 = vunpack.c.l.b16 %v524
  %v653 = vunpack.c.l.b16 %v525
  %v654 = vunpack.c.l.b16 %v526
  %v655 = vunpack.c.l.b16 %v527
  %v656 = vunpack.c.l.b16 %v528
  %v657 = vunpack.c.l.b16 %v529
  %v658 = vunpack.c.l.b16 %v530
  %v659 = vunpack.c.l.b16 %v531
  %v660 = vunpack.c.l.b16 %v532
  %v661 = vunpack.c.l.b16 %v533
  %v662 = vunpack.c.l.b16 %v534
  %v663 = vunpack.c.l.b16 %v535
  %v664 = vunpack.c.l.b16 %v536
  %v665 = vunpack.c.l.b16 %v537
  %v666 = vunpack.c.l.b16 %v538
  %v667 = vunpack.c.l.b16 %v539
  %v668 = vunpack.c.l.b16 %v540
  %v669 = vunpack.c.l.b16 %v541
  %v670 = vunpack.c.l.b16 %v542
  %v671 = vunpack.c.l.b16 %v543
  %v672 = vunpack.c.l.b16 %v544
  %v673 = vunpack.c.l.b16 %v545
  %v674 = vunpack.c.l.b16 %v546
  %v675 = vunpack.c.l.b16 %v547
  %v676 = vunpack.c.l.b16 %v548
  %v677 = vunpack.c.l.b16 %v549
  %v678 = vunpack.c.l.b16 %v550
  %v679 = vunpack.c.l.b16 %v551
  %v680 = vunpack.c.l.b16 %v552
  %v681 = vunpack.c.l.b16 %v553
  %v682 = vunpack.c.l.b16 %v554
  %v683 = vunpack.c.l.b16 %v555
  %v684 = vunpack.c.l.b16 %v556
  %v685 = vunpack.c.l.b16 %v557
  %v686 = vunpack.c.l.b16 %v558
  %v687 = vunpack.c.l.b16 %v559
  %v688 = vunpack.c.l.b16 %v560
  %v689 = vunpack.c.l.b16 %v561
  %v690 = vunpack.c.l.b16 %v562
  %v691 = vunpack.c.l.b16 %v563
  %v692 = vunpack.c.l.b16 %v564
  %v693 = vunpack.c.l.b16 %v565
  %v694 = vunpack.c.l.b16 %v566
  %v695 = vpack.c.b16 %v632, %v631
  %v696 = vpack.c.b16 %v634, %v633
  %v697 = vpack.c.b16 %v636, %v635
  %v698 = vpack.c.b16 %v638, %v637
  %v699 = vpack.c.b16 %v640, %v639
  %v700 = vpack.c.b16 %v642, %v641
  %v701 = vpack.c.b16 %v644, %v643
  %v702 = vpack.c.b16 %v646, %v645
  %v703 = vpack.c.b16 %v648, %v647
  %v704 = vpack.c.b16 %v650, %v649
  %v705 = vpack.c.b16 %v652, %v651
  %v706 = vpack.c.b16 %v654, %v653
  %v707 = vpack.c.b16 %v656, %v655
  %v708 = vpack.c.b16 %v658, %v657
  %v709 = vpack.c.b16 %v660, %v659
  %v710 = vpack.c.b16 %v662, %v661
  %v711 = vpack.c.b16 %v664, %v663
  %v712 = vpack.c.b16 %v666, %v665
  %v713 = vpack.c.b16 %v668, %v667
  %v714 = vpack.c.b16 %v670, %v669
  %v715 = vpack.c.b16 %v672, %v671
  %v716 = vpack.c.b16 %v674, %v673
  %v717 = vpack.c.b16 %v676, %v675
  %v718 = vpack.c.b16 %v678, %v677
  %v719 = vpack.c.b16 %v680, %v679
  %v720 = vpack.c.b16 %v682, %v681
  %v721 = vpack.c.b16 %v684, %v683
  %v722 = vpack.c.b16 %v686, %v685
  %v723 = vpack.c.b16 %v688, %v687
  %v724 = vpack.c.b16 %v690, %v689
  %v725 = vpack.c.b16 %v692, %v691
  %v726 = vpack.c.b16 %v694, %v693
  %759 = vmatprep.subr.bf16.mxu0 0
  %760 = vmatpush1.bf16.msra.mxu0 %v695
  %761 = vmatprep.subr.bf16.mxu0 0
  %762 = vmatpush1.bf16.msra.mxu0 %v696
  %763 = vmatprep.subr.bf16.mxu0 0
  %764 = vmatpush1.bf16.msra.mxu0 %v697
  %765 = vmatprep.subr.bf16.mxu0 0
  %766 = vmatpush1.bf16.msra.mxu0 %v698
  %767 = vmatprep.subr.bf16.mxu0 0
  %768 = vmatpush1.bf16.msra.mxu0 %v699
  %769 = vmatprep.subr.bf16.mxu0 0
  %770 = vmatpush1.bf16.msra.mxu0 %v700
  %771 = vmatprep.subr.bf16.mxu0 0
  %772 = vmatpush1.bf16.msra.mxu0 %v701
  %773 = vmatprep.subr.bf16.mxu0 0
  %774 = vmatpush1.bf16.msra.mxu0 %v702
  %775 = vmatprep.subr.bf16.mxu0 0
  %776 = vmatpush1.bf16.msra.mxu0 %v703
  %777 = vmatprep.subr.bf16.mxu0 0
  %778 = vmatpush1.bf16.msra.mxu0 %v704
  %779 = vmatprep.subr.bf16.mxu0 0
  %780 = vmatpush1.bf16.msra.mxu0 %v705
  %781 = vmatprep.subr.bf16.mxu0 0
  %782 = vmatpush1.bf16.msra.mxu0 %v706
  %783 = vmatprep.subr.bf16.mxu0 0
  %784 = vmatpush1.bf16.msra.mxu0 %v707
  %785 = vmatprep.subr.bf16.mxu0 0
  %786 = vmatpush1.bf16.msra.mxu0 %v708
  %787 = vmatprep.subr.bf16.mxu0 0
  %788 = vmatpush1.bf16.msra.mxu0 %v709
  %789 = vmatprep.subr.bf16.mxu0 0
  %790 = vmatpush1.bf16.msra.mxu0 %v710
  %791 = vmatprep.mubr.bf16.mxu0 %v500
  %792 = vmatmul.mubr.bf16.gmra.mrb[0].mxu0 %v499
  %v793 = vpop.f32.mrb[0].mxu0
  %v794 = vadd.f32 0.0, %v793
  %v795 = vpop.f32.mrb[0].mxu0
  %v796 = vpop.f32.mrb[0].mxu0
  %v797 = vadd.f32 0.0, %v796
  %v798 = vpop.f32.mrb[0].mxu0
  %799 = vdwg.mxu0
  %800 = vmatprep.subr.bf16.mxu0 0
  %801 = vmatpush1.bf16.msra.mxu0 %v711
  %802 = vmatprep.subr.bf16.mxu0 0
  %803 = vmatpush1.bf16.msra.mxu0 %v712
  %804 = vmatprep.subr.bf16.mxu0 0
  %805 = vmatpush1.bf16.msra.mxu0 %v713
  %806 = vmatprep.subr.bf16.mxu0 0
  %807 = vmatpush1.bf16.msra.mxu0 %v714
  %808 = vmatprep.subr.bf16.mxu0 0
  %809 = vmatpush1.bf16.msra.mxu0 %v715
  %810 = vmatprep.subr.bf16.mxu0 0
  %811 = vmatpush1.bf16.msra.mxu0 %v716
  %812 = vmatprep.subr.bf16.mxu0 0
  %813 = vmatpush1.bf16.msra.mxu0 %v717
  %814 = vmatprep.subr.bf16.mxu0 0
  %815 = vmatpush1.bf16.msra.mxu0 %v718
  %816 = vmatprep.subr.bf16.mxu0 0
  %817 = vmatpush1.bf16.msra.mxu0 %v719
  %818 = vmatprep.subr.bf16.mxu0 0
  %819 = vmatpush1.bf16.msra.mxu0 %v720
  %820 = vmatprep.subr.bf16.mxu0 0
  %821 = vmatpush1.bf16.msra.mxu0 %v721
  %822 = vmatprep.subr.bf16.mxu0 0
  %823 = vmatpush1.bf16.msra.mxu0 %v722
  %824 = vmatprep.subr.bf16.mxu0 0
  %825 = vmatpush1.bf16.msra.mxu0 %v723
  %826 = vmatprep.subr.bf16.mxu0 0
  %827 = vmatpush1.bf16.msra.mxu0 %v724
  %828 = vmatprep.subr.bf16.mxu0 0
  %829 = vmatpush1.bf16.msra.mxu0 %v725
  %830 = vmatprep.subr.bf16.mxu0 0
  %831 = vmatpush1.bf16.msra.mxu0 %v726
  %832 = vmatprep.mubr.bf16.mxu0 %v502
  %833 = vmatmul.mubr.bf16.gmra.mrb[0].mxu0 %v501
  %v834 = vpop.f32.mrb[0].mxu0
  %v835 = vadd.f32 %v794, %v834
  %v836 = vpop.f32.mrb[0].mxu0
  %v837 = vpop.f32.mrb[0].mxu0
  %v838 = vadd.f32 %v797, %v837
  %v839 = vpop.f32.mrb[0].mxu0
  %840 = vdwg.mxu0
  %v841 = vxor.u32 %v835, 2147483648
  %v842 = vxor.u32 %v838, 2147483648
  %v843 = vmul.f32 %v841, 1.442695
  %v844 = vpow.pop %v843
  %v845 = vmul.f32 %v842, 1.442695
  %v846 = vpow.pop %v845
  %v847 = vadd.f32 %v844, 1.0
  %v848 = vadd.f32 %v846, 1.0
  %v849 = vrcp.pop %v847
  %v850 = vmul.f32 1.0, %v849
  %v851 = vrcp.pop %v848
  %v852 = vmul.f32 1.0, %v851
  %853 = vst [vmem:[%s3] sm:$0xff] %v850
  %854 = vst [vmem:[%s3 + $0x8] sm:$0xff] %v852
  // Predicated region
  $region14: #{mlp_forward.1} parent=0 // pred_check
    _
  $region15: #{mlp_forward.1} parent=0 // pred_check_branch
    %856 = sbr.rel (0) target = $region17
  $region16: #{mlp_forward.1} parent=0 // pred_region
    _
  $region17: #{mlp_forward.1} parent=0 // pred_fallthru
    _
  // Predicated region
  $region18: #{mlp_forward.1} parent=0 // pred_check
    _
  $region19: #{mlp_forward.1} parent=0 // pred_check_branch
    %858 = sbr.rel (0) target = $region21
  $region20: #{mlp_forward.1} parent=0 // pred_region
    _
  $region21: #{mlp_forward.1} parent=0 // pred_fallthru
    _

</llo_original>
